<compile_context>
chip_gen: v7x
topology: tpu7x:2x2x1
jax: 0.10.0
libtpu: 0.0.40
codegen_flags: <defaults>
</compile_context>

<pallas_src>
import functools

import jax
import jax.numpy as jnp
from jax import lax
from jax.experimental import pallas as pl
from jax.experimental.pallas import tpu as pltpu


_CHUNK_TARGET_ELEMS = 64 * 1024       # ~256 KB per f32 temporary inside the kernel
_MAX_BLOCK_ELEMS = 2 * 1024 * 1024    # cap on per-grid-step block size (elements)


def _neg_pos(y_true, y_pred, eps):
    neg = y_true * -jnp.log(y_pred + eps)
    pos = (1.0 - y_true) * -jnp.log(1.0 - y_pred + eps)
    return neg, pos


def _sum_to_1x1(x):
    # (m, k) -> (1, 1): sublane reduce then lane reduce (tiny, finalize-only).
    return jnp.sum(jnp.sum(x, axis=0, keepdims=True), axis=1, keepdims=True)


def _pack_sums(s_neg, s_pos, s_yt):
    """Pack three (1,1) scalars into lanes 0/1/2 of sublane 0 of an (8,128) tile."""
    lane = jax.lax.broadcasted_iota(jnp.int32, (8, 128), 1)
    sub = jax.lax.broadcasted_iota(jnp.int32, (8, 128), 0)
    row0 = sub == 0
    return (jnp.where(row0 & (lane == 0), s_neg, 0.0)
            + jnp.where(row0 & (lane == 1), s_pos, 0.0)
            + jnp.where(row0 & (lane == 2), s_yt, 0.0))


def _mse_sums_small_kernel(yt_ref, yp_ref, out_ref, *, eps):
    """Whole-array single-step variant for small inputs."""
    yt = yt_ref[...].astype(jnp.float32)
    yp = yp_ref[...].astype(jnp.float32)
    neg, pos = _neg_pos(yt, yp, eps)
    out_ref[...] = _pack_sums(_sum_to_1x1(neg), _sum_to_1x1(pos), _sum_to_1x1(yt))


def _mse_sums_kernel(yt_ref, yp_ref, out_ref, neg_acc, pos_acc, yt_acc, *,
                     eps, m_tile, rows_per_chunk, lane_width, m_total, unroll):
    i = pl.program_id(0)                 # shard axis ("parallel": both TCs on v7x)
    k = pl.program_id(1)                 # streaming axis ("arbitrary")
    n_inner = pl.num_programs(1)

    @pl.when(k == 0)
    def _init():
        neg_acc[...] = jnp.zeros_like(neg_acc)
        pos_acc[...] = jnp.zeros_like(pos_acc)
        yt_acc[...] = jnp.zeros_like(yt_acc)

    g = i * n_inner + k                  # unclamped global block index
    start_row = g * m_tile
    n_chunks = m_tile // rows_per_chunk

    def accumulate(c, masked):
        r0 = pl.multiple_of(c * rows_per_chunk, rows_per_chunk)
        yt = yt_ref[pl.ds(r0, rows_per_chunk), :].astype(jnp.float32)
        yp = yp_ref[pl.ds(r0, rows_per_chunk), :].astype(jnp.float32)
        neg, pos = _neg_pos(yt, yp, eps)
        if masked:
            # Select (not multiply): out-of-range data is undefined / may be NaN.
            rows = jax.lax.broadcasted_iota(
                jnp.int32, (rows_per_chunk, lane_width), 0)
            valid = (start_row + r0 + rows) < m_total
            neg = jnp.where(valid, neg, 0.0)
            pos = jnp.where(valid, pos, 0.0)
            yt = jnp.where(valid, yt, 0.0)
        # Fold the chunk to (8, lane): pure VPU vreg adds, no XLU, tiny RMW.
        s3 = (rows_per_chunk // 8, 8, lane_width)
        neg_acc[...] += jnp.sum(neg.reshape(s3), axis=0)
        pos_acc[...] += jnp.sum(pos.reshape(s3), axis=0)
        yt_acc[...] += jnp.sum(yt.reshape(s3), axis=0)

    def _run_chunks(masked):
        def body(c, carry):
            accumulate(c, masked)
            return carry
        lax.fori_loop(0, n_chunks, body, 0, unroll=unroll)

    # Only blocks that straddle (or exceed) the end of the valid rows pay for
    # the mask; interior blocks run the pure streaming path.
    needs_mask = (start_row + m_tile) > m_total

    @pl.when(jnp.logical_not(needs_mask))
    def _interior():
        _run_chunks(False)

    @pl.when(needs_mask)
    def _edge():
        _run_chunks(True)

    @pl.when(k == n_inner - 1)
    def _finalize():
        out_ref[...] = _pack_sums(_sum_to_1x1(neg_acc[...]),
                                  _sum_to_1x1(pos_acc[...]),
                                  _sum_to_1x1(yt_acc[...]))


def _vmem_limit_bytes():
    try:
        cap = int(pltpu.get_tpu_info().vmem_capacity_bytes)
    except Exception:
        cap = 64 * 1024 * 1024           # conservative (v7x-sized) fallback
    return int(max(32 * 1024 * 1024, min(cap * 6 // 10, 96 * 1024 * 1024)))


def _pallas_partial_sums(y_true2d, y_pred2d, eps):
    """Returns an (R, 128) f32 array whose column sums hold
    (sum_neg, sum_pos, sum_y_true) in lanes 0, 1, 2."""
    m_total, lane_width = y_true2d.shape
    rows_per_chunk = max(8, (_CHUNK_TARGET_ELEMS // lane_width) // 8 * 8)

    if m_total <= rows_per_chunk:
        # Small input: single grid step, whole arrays resident in VMEM.
        return pl.pallas_call(
            functools.partial(_mse_sums_small_kernel, eps=eps),
            out_shape=jax.ShapeDtypeStruct((8, 128), jnp.float32),
            grid=(1,),
            in_specs=[pl.BlockSpec((m_total, lane_width), lambda i: (0, 0)),
                      pl.BlockSpec((m_total, lane_width), lambda i: (0, 0))],
            out_specs=pl.BlockSpec((8, 128), lambda i: (0, 0)),
        )(y_true2d, y_pred2d)

    # Generation-aware block sizing: 2 inputs x 2 pipeline buffers must stay
    # well under the scoped-VMEM limit (64 MiB physical on v7x, 128 on v5e/v6e).
    vmem_limit = _vmem_limit_bytes()
    chunk_elems = rows_per_chunk * lane_width
    bytes_per_elem = y_true2d.dtype.itemsize + y_pred2d.dtype.itemsize
    block_elems = max(chunk_elems,
                      min(_MAX_BLOCK_ELEMS, vmem_limit // (4 * bytes_per_elem)))
    chunks_per_block = max(1, block_elems // chunk_elems)
    m_tile = min(rows_per_chunk * chunks_per_block,
                 (m_total // rows_per_chunk) * rows_per_chunk)
    n_blocks = pl.cdiv(m_total, m_tile)
    n_shards = 2 if n_blocks >= 2 else 1   # feeds both v7x TensorCores; harmless on 1-TC chips
    n_inner = pl.cdiv(n_blocks, n_shards)
    n_chunks = m_tile // rows_per_chunk

    def block_map(i, k):
        # Clamp so a possible overhang step of the last shard re-reads the final
        # in-bounds block; its contribution is masked to zero inside the kernel.
        return (jnp.minimum(i * n_inner + k, n_blocks - 1), 0)

    kernel = functools.partial(
        _mse_sums_kernel, eps=eps, m_tile=m_tile, rows_per_chunk=rows_per_chunk,
        lane_width=lane_width, m_total=m_total, unroll=(n_chunks <= 8))

    return pl.pallas_call(
        kernel,
        out_shape=jax.ShapeDtypeStruct((8 * n_shards, 128), jnp.float32),
        grid_spec=pltpu.PrefetchScalarGridSpec(
            num_scalar_prefetch=0,
            grid=(n_shards, n_inner),
            in_specs=[pl.BlockSpec((m_tile, lane_width), block_map),
                      pl.BlockSpec((m_tile, lane_width), block_map)],
            out_specs=pl.BlockSpec((8, 128), lambda i, k: (i, 0)),
            scratch_shapes=[pltpu.VMEM((8, lane_width), jnp.float32)] * 3,
        ),
        compiler_params=pltpu.CompilerParams(
            dimension_semantics=("parallel", "arbitrary"),
            vmem_limit_bytes=vmem_limit,
        ),
    )(y_true2d, y_pred2d)


def mse_loss(input_data, input_labels, *, negative_loss_factor: int = 50,
             eps: float = 1e-8):
    """Pallas TPU implementation of MSE_Loss.forward.

    loss = pos_loss + negative_loss_factor * neg_loss, where
      neg_loss = sum(y_true * -log(y_pred + eps))       / max(1, sum(y_true))
      pos_loss = sum((1-y_true) * -log(1-y_pred + eps)) / max(1, sum(1-y_true))
    """
    flat_true = jnp.reshape(input_data, (-1,))
    flat_pred = jnp.reshape(input_labels, (-1,))
    n = flat_true.shape[0]

    # Lane width: largest multiple of 128 that divides the element count
    # (zero-copy reshape).  Otherwise: 128-aligned head through the kernel and
    # a <128-element tail reduced with plain JAX (no jnp.pad HBM pass).
    lane_width = 0
    for cand in (2048, 1024, 512, 256, 128):
        if n % cand == 0:
            lane_width = cand
            break
    if lane_width:
        head = n
    else:
        # TODO(synk): the head slice still costs one copy pass for sizes not
        # divisible by 128; a manual-DMA (pl.ANY) path could read in place.
        lane_width = 128
        head = (n // lane_width) * lane_width
    tail = n - head

    s_neg = jnp.float32(0.0)
    s_pos = jnp.float32(0.0)
    s_yt = jnp.float32(0.0)

    if head > 0:
        head_true = flat_true if head == n else flat_true[:head]
        head_pred = flat_pred if head == n else flat_pred[:head]
        y_true2d = head_true.reshape(head // lane_width, lane_width)
        y_pred2d = head_pred.reshape(head // lane_width, lane_width)
        partial = _pallas_partial_sums(y_true2d, y_pred2d, float(eps))
        tot = jnp.sum(partial, axis=0)          # (128,)
        s_neg = s_neg + tot[0]
        s_pos = s_pos + tot[1]
        s_yt = s_yt + tot[2]

    if tail > 0:
        yt_t = flat_true[head:].astype(jnp.float32)
        yp_t = flat_pred[head:].astype(jnp.float32)
        neg_t, pos_t = _neg_pos(yt_t, yp_t, float(eps))
        s_neg = s_neg + jnp.sum(neg_t)
        s_pos = s_pos + jnp.sum(pos_t)
        s_yt = s_yt + jnp.sum(yt_t)

    # Counts kept in f32 to match the torch reference (same rounding behaviour).
    neg_loss = s_neg / jnp.maximum(jnp.float32(1.0), s_yt)
    pos_loss = s_pos / jnp.maximum(jnp.float32(1.0), jnp.float32(n) - s_yt)
    return pos_loss + negative_loss_factor * neg_loss


def _mse_loss_ref(input_data, input_labels, negative_loss_factor=50, eps=1e-8):
    """Pure-JAX reference matching the PyTorch forward exactly."""
    B = input_data.shape[0]
    y_pred = input_labels.reshape(B, -1).astype(jnp.float32)
    y_true = input_data.reshape(B, -1).astype(jnp.float32)
    neg = y_true * -jnp.log(y_pred + eps)
    pos = (1.0 - y_true) * -jnp.log(1.0 - y_pred + eps)
    neg_loss = jnp.sum(neg) / jnp.maximum(1.0, jnp.sum(y_true))
    pos_loss = jnp.sum(pos) / jnp.maximum(1.0, jnp.sum(1.0 - y_true))
    return pos_loss + negative_loss_factor * neg_loss


if __name__ == "__main__":
    key = jax.random.PRNGKey(0)

    shapes = [
        (2, 4, 16, 16),    # 2048 elems: small single-block path
        (2, 3, 17, 19),    # 1938 elems: 128-aligned head + <128-elem JAX tail
        (3, 100, 32, 32),  # 307200 elems: multi-block path, 2-shard grid + edge mask
    ]

    for idx, shape in enumerate(shapes):
        k1, k2 = jax.random.split(jax.random.fold_in(key, idx))
        input_data = jax.random.bernoulli(k1, p=0.3, shape=shape).astype(jnp.float32)
        input_labels = jax.random.uniform(k2, shape, jnp.float32,
                                          minval=0.01, maxval=0.99)

        loss = jax.block_until_ready(
            mse_loss(input_data, input_labels, negative_loss_factor=50))
        ref = _mse_loss_ref(input_data, input_labels, negative_loss_factor=50)
        assert jnp.allclose(loss, ref, rtol=1e-5, atol=1e-5), (shape, loss, ref)

    print("KERNEL_OK")
</pallas_src>

<mosaic_0001>
module attributes {stable_mosaic.version = 11 : i64} {
  func.func @_mse_sums_small_kernel(%arg0: i32, %arg1: memref<1x2048xf32, #tpu.memory_space<vmem>>, %arg2: memref<1x2048xf32, #tpu.memory_space<vmem>>, %arg3: memref<8x128xf32, #tpu.memory_space<vmem>>) attributes {dimension_semantics = [#tpu.dimension_semantics<arbitrary>], iteration_bounds = array<i64: 1>, scalar_prefetch = 0 : i64, scratch_operands = 0 : i64, tpu.core_type = #tpu.core_type<tc>, window_params = [{pipeline_mode = #tpu.pipeline_mode<synchronous>, transform_indices = @transform_0, window_bounds = array<i64: 1, 2048>}, {pipeline_mode = #tpu.pipeline_mode<synchronous>, transform_indices = @transform_1, window_bounds = array<i64: 1, 2048>}, {pipeline_mode = #tpu.pipeline_mode<synchronous>, transform_indices = @transform_2, window_bounds = array<i64: 8, 128>}]} {
    %c0 = arith.constant 0 : index
    %c0_0 = arith.constant 0 : index
    %0 = vector.load %arg1[%c0, %c0_0] : memref<1x2048xf32, #tpu.memory_space<vmem>>, vector<1x2048xf32>
    %c0_1 = arith.constant 0 : index
    %c0_2 = arith.constant 0 : index
    %1 = vector.load %arg2[%c0_1, %c0_2] : memref<1x2048xf32, #tpu.memory_space<vmem>>, vector<1x2048xf32>
    %cst = arith.constant 9.99999993E-9 : f32
    %2 = vector.broadcast %cst : f32 to vector<1x2048xf32>
    %3 = arith.addf %1, %2 : vector<1x2048xf32>
    %4 = math.log %3 : vector<1x2048xf32>
    %cst_3 = arith.constant 0.000000e+00 : f32
    %5 = vector.broadcast %cst_3 : f32 to vector<1x2048xf32>
    %6 = arith.subf %5, %4 : vector<1x2048xf32>
    %7 = arith.mulf %0, %6 : vector<1x2048xf32>
    %cst_4 = arith.constant 1.000000e+00 : f32
    %8 = vector.broadcast %cst_4 : f32 to vector<1x2048xf32>
    %9 = arith.subf %8, %0 : vector<1x2048xf32>
    %cst_5 = arith.constant 1.000000e+00 : f32
    %10 = vector.broadcast %cst_5 : f32 to vector<1x2048xf32>
    %11 = arith.subf %10, %1 : vector<1x2048xf32>
    %cst_6 = arith.constant 9.99999993E-9 : f32
    %12 = vector.broadcast %cst_6 : f32 to vector<1x2048xf32>
    %13 = arith.addf %11, %12 : vector<1x2048xf32>
    %14 = math.log %13 : vector<1x2048xf32>
    %cst_7 = arith.constant 0.000000e+00 : f32
    %15 = vector.broadcast %cst_7 : f32 to vector<1x2048xf32>
    %16 = arith.subf %15, %14 : vector<1x2048xf32>
    %17 = arith.mulf %9, %16 : vector<1x2048xf32>
    %cst_8 = arith.constant dense<0.000000e+00> : vector<2048xf32>
    %18 = vector.multi_reduction <add>, %7, %cst_8 [0] : vector<1x2048xf32> to vector<2048xf32>
    %19 = vector.shape_cast %18 : vector<2048xf32> to vector<1x2048xf32>
    %cst_9 = arith.constant dense<0.000000e+00> : vector<1xf32>
    %20 = vector.multi_reduction <add>, %19, %cst_9 [1] : vector<1x2048xf32> to vector<1xf32>
    %21 = vector.shape_cast %20 : vector<1xf32> to vector<1x1xf32>
    %cst_10 = arith.constant dense<0.000000e+00> : vector<2048xf32>
    %22 = vector.multi_reduction <add>, %17, %cst_10 [0] : vector<1x2048xf32> to vector<2048xf32>
    %23 = vector.shape_cast %22 : vector<2048xf32> to vector<1x2048xf32>
    %cst_11 = arith.constant dense<0.000000e+00> : vector<1xf32>
    %24 = vector.multi_reduction <add>, %23, %cst_11 [1] : vector<1x2048xf32> to vector<1xf32>
    %25 = vector.shape_cast %24 : vector<1xf32> to vector<1x1xf32>
    %cst_12 = arith.constant dense<0.000000e+00> : vector<2048xf32>
    %26 = vector.multi_reduction <add>, %0, %cst_12 [0] : vector<1x2048xf32> to vector<2048xf32>
    %27 = vector.shape_cast %26 : vector<2048xf32> to vector<1x2048xf32>
    %cst_13 = arith.constant dense<0.000000e+00> : vector<1xf32>
    %28 = vector.multi_reduction <add>, %27, %cst_13 [1] : vector<1x2048xf32> to vector<1xf32>
    %29 = vector.shape_cast %28 : vector<1xf32> to vector<1x1xf32>
    %30 = tpu.iota {dimensions = array<i32: 1>} : vector<8x128xi32>
    %31 = tpu.iota {dimensions = array<i32: 0>} : vector<8x128xi32>
    %c0_i32 = arith.constant 0 : i32
    %32 = vector.broadcast %c0_i32 : i32 to vector<8x128xi32>
    %33 = arith.cmpi eq, %31, %32 : vector<8x128xi32>
    %c0_i32_14 = arith.constant 0 : i32
    %34 = vector.broadcast %c0_i32_14 : i32 to vector<8x128xi32>
    %35 = arith.cmpi eq, %30, %34 : vector<8x128xi32>
    %36 = arith.andi %33, %35 : vector<8x128xi1>
    %cst_15 = arith.constant 0.000000e+00 : f32
    %37 = vector.shape_cast %21 : vector<1x1xf32> to vector<1x1xf32>
    %38 = vector.broadcast %37 : vector<1x1xf32> to vector<8x128xf32>
    %39 = vector.broadcast %cst_15 : f32 to vector<8x128xf32>
    %40 = arith.select %36, %38, %39 : vector<8x128xi1>, vector<8x128xf32>
    %c1_i32 = arith.constant 1 : i32
    %41 = vector.broadcast %c1_i32 : i32 to vector<8x128xi32>
    %42 = arith.cmpi eq, %30, %41 : vector<8x128xi32>
    %43 = arith.andi %33, %42 : vector<8x128xi1>
    %cst_16 = arith.constant 0.000000e+00 : f32
    %44 = vector.shape_cast %25 : vector<1x1xf32> to vector<1x1xf32>
    %45 = vector.broadcast %44 : vector<1x1xf32> to vector<8x128xf32>
    %46 = vector.broadcast %cst_16 : f32 to vector<8x128xf32>
    %47 = arith.select %43, %45, %46 : vector<8x128xi1>, vector<8x128xf32>
    %48 = arith.addf %40, %47 : vector<8x128xf32>
    %c2_i32 = arith.constant 2 : i32
    %49 = vector.broadcast %c2_i32 : i32 to vector<8x128xi32>
    %50 = arith.cmpi eq, %30, %49 : vector<8x128xi32>
    %51 = arith.andi %33, %50 : vector<8x128xi1>
    %cst_17 = arith.constant 0.000000e+00 : f32
    %52 = vector.shape_cast %29 : vector<1x1xf32> to vector<1x1xf32>
    %53 = vector.broadcast %52 : vector<1x1xf32> to vector<8x128xf32>
    %54 = vector.broadcast %cst_17 : f32 to vector<8x128xf32>
    %55 = arith.select %51, %53, %54 : vector<8x128xi1>, vector<8x128xf32>
    %56 = arith.addf %48, %55 : vector<8x128xf32>
    %c0_18 = arith.constant 0 : index
    %c0_19 = arith.constant 0 : index
    %57 = vector.load %arg3[%c0_18, %c0_19] : memref<8x128xf32, #tpu.memory_space<vmem>>, vector<8x128xf32>
    tpu.vector_store %arg3[%c0_18, %c0_19], %56 {strides = array<i32>} : memref<8x128xf32, #tpu.memory_space<vmem>>, vector<8x128xf32>,
    return
  }
  func.func @transform_0(%arg0: i32) -> (i32, i32) {
    %c0_i32 = arith.constant 0 : i32
    %c0_i32_0 = arith.constant 0 : i32
    %c0_i32_1 = arith.constant 0 : i32
    return %c0_i32, %c0_i32_0 : i32, i32
  }
  func.func @transform_1(%arg0: i32) -> (i32, i32) {
    %c0_i32 = arith.constant 0 : i32
    %c0_i32_0 = arith.constant 0 : i32
    %c0_i32_1 = arith.constant 0 : i32
    return %c0_i32, %c0_i32_0 : i32, i32
  }
  func.func @transform_2(%arg0: i32) -> (i32, i32) {
    %c0_i32 = arith.constant 0 : i32
    %c0_i32_0 = arith.constant 0 : i32
    %c0_i32_1 = arith.constant 0 : i32
    return %c0_i32, %c0_i32_0 : i32, i32
  }
}

</mosaic_0001>

<llo_original>
// kernel: tpu_custom_call.1
$region0: #{tpu_custom_call.1}
  #allocation0 [shape = 'u32[]', space=smem, size = 0x4, offset = 0x4, fixed_abs, tag = 'smem constant byte address 0x4 - core index']
  #allocation1 [shape = 'u32[144,128]{1,0:T(1,128)}', space=vmem, size = 0x12000, scoped, tag = 'internal scratch']
  %s0 = inlined_call_operand.hbm [shape: f32[1,2048], index: 0, kind: input, shape index: {}]
  %s1 = inlined_call_operand.hbm [shape: f32[1,2048], index: 1, kind: input, shape index: {}]
  %s2 = inlined_call_operand.hbm [shape: f32[8,128], index: 2, kind: output, shape index: {}]
  %s3 = sld [smem:[#allocation0]]
  $region26: #{tpu_custom_call.1} parent=0
    _
  %s5 = ssub.s32 1, %s3
  %s6 = scalar_select 0, %s5, %s3
  $region1: #{tpu_custom_call.1} parent=0
    #allocation2 [shape = 'u8[8192]{0}', space=vmem, size = 0x2000, scoped, tag = 'input window, operand 0, single buffered']
    #allocation3 [shape = 's32[1]{0}', space=sflag, size = 0x4, scoped, tag = 'scoped memory for tpu_custom_call.1']
    #allocation4 [shape = 's32[1]{0}', space=sflag, size = 0x4, scoped, tag = 'scoped memory for tpu_custom_call.1']
    #allocation5 [shape = 'u8[8192]{0}', space=vmem, size = 0x2000, scoped, tag = 'input window, operand 1, single buffered']
    #allocation6 [shape = 's32[1]{0}', space=sflag, size = 0x4, scoped, tag = 'scoped memory for tpu_custom_call.1']
    #allocation7 [shape = 'u8[4096]{0}', space=vmem, size = 0x1000, scoped, tag = 'output window, operand 0, single buffered']
    %7 = vsyncpa [#allocation3], 0
    %8 = vsyncpa [#allocation6], 0
    %9 = vsyncpa [#allocation4], 0
    // Predicated region
    $region2: #{tpu_custom_call.1} parent=1 // pred_check
      _
    $region3: #{tpu_custom_call.1} parent=1 // pred_check_branch
      %11 = sbr.rel (0) target = $region5
    $region4: #{tpu_custom_call.1} parent=1 // pred_region
      %s13 = ssub.s32 256, 256
      %14 = vsyncadd [#allocation3], %s13
      %s16 = sshll.u32 [#allocation2], 4
      %s17 = int_to_ptr.vmem [resolvable:$true] %s16
      %19 = dma.hbm_to_vmem [thread:$0]  %s0, 256, %s17, [#allocation3]
    $region5: #{tpu_custom_call.1} parent=1 // pred_fallthru
      _
    // Predicated region
    $region6: #{tpu_custom_call.1} parent=1 // pred_check
      _
    $region7: #{tpu_custom_call.1} parent=1 // pred_check_branch
      %21 = sbr.rel (0) target = $region9
    $region8: #{tpu_custom_call.1} parent=1 // pred_region
      %s23 = ssub.s32 256, 256
      %24 = vsyncadd [#allocation6], %s23
      %s26 = sshll.u32 [#allocation5], 4
      %s27 = int_to_ptr.vmem [resolvable:$true] %s26
      %29 = dma.hbm_to_vmem [thread:$0]  %s1, 256, %s27, [#allocation6]
    $region9: #{tpu_custom_call.1} parent=1 // pred_fallthru
      _
    // Predicated region
    $region10: #{tpu_custom_call.1} parent=1 // pred_check
      _
    $region11: #{tpu_custom_call.1} parent=1 // pred_check_branch
      %31 = sbr.rel (0) target = $region13
    $region12: #{tpu_custom_call.1} parent=1 // pred_region
      %32 = dma.done [#allocation3], 256
    $region13: #{tpu_custom_call.1} parent=1 // pred_fallthru
      _
    // Predicated region
    $region14: #{tpu_custom_call.1} parent=1 // pred_check
      _
    $region15: #{tpu_custom_call.1} parent=1 // pred_check_branch
      %34 = sbr.rel (0) target = $region17
    $region16: #{tpu_custom_call.1} parent=1 // pred_region
      %35 = dma.done [#allocation6], 256
    $region17: #{tpu_custom_call.1} parent=1 // pred_fallthru
      _
    %v36 = vld [vmem:[#allocation2] sm:$0xff]
    %v37 = vld [vmem:[#allocation2 + $0x8] sm:$0xff]
    %v38 = vld [vmem:[#allocation5] sm:$0xff]
    %v39 = vld [vmem:[#allocation5 + $0x8] sm:$0xff]
    %v40 = vadd.f32 %v38, 1e-08
    %v41 = vadd.f32 %v39, 1e-08
    %v42 = vlog2.pop %v40
    %v43 = vmul.f32 %v42, 0.6931472
    %v44 = vlog2.pop %v41
    %v45 = vmul.f32 %v44, 0.6931472
    %v46 = vsub.f32 0.0, %v43
    %v47 = vsub.f32 0.0, %v45
    %v48 = vmul.f32 %v36, %v46
    %v49 = vmul.f32 %v37, %v47
    %v50 = vsub.f32 1.0, %v36
    %v51 = vsub.f32 1.0, %v37
    %v52 = vsub.f32 1.0, %v38
    %v53 = vsub.f32 1.0, %v39
    %v54 = vadd.f32 %v52, 1e-08
    %v55 = vadd.f32 %v53, 1e-08
    %v56 = vlog2.pop %v54
    %v57 = vmul.f32 %v56, 0.6931472
    %v58 = vlog2.pop %v55
    %v59 = vmul.f32 %v58, 0.6931472
    %v60 = vsub.f32 0.0, %v57
    %v61 = vsub.f32 0.0, %v59
    %v62 = vmul.f32 %v50, %v60
    %v63 = vmul.f32 %v51, %v61
    %v64 = vadd.f32 %v48, 0.0
    %v65 = vadd.f32 %v49, 0.0
    %v68 = vlaneseq
    %v69 = vshrl.u32 %v68, 7
    %v70 = vsub.s32 0, %v69
    %v71 = vrot.slane %v64, %v70
    %v72 = vlaneseq
    %v73 = vshrl.u32 %v72, 7
    %v74 = vsub.s32 1, %v73
    %v75 = vrot.slane %v64, %v74
    %v76 = vlaneseq
    %v77 = vshrl.u32 %v76, 7
    %v78 = vsub.s32 2, %v77
    %v79 = vrot.slane %v64, %v78
    %v80 = vlaneseq
    %v81 = vshrl.u32 %v80, 7
    %v82 = vsub.s32 3, %v81
    %v83 = vrot.slane %v64, %v82
    %v84 = vlaneseq
    %v85 = vshrl.u32 %v84, 7
    %v86 = vsub.s32 4, %v85
    %v87 = vrot.slane %v64, %v86
    %v88 = vlaneseq
    %v89 = vshrl.u32 %v88, 7
    %v90 = vsub.s32 5, %v89
    %v91 = vrot.slane %v64, %v90
    %v92 = vlaneseq
    %v93 = vshrl.u32 %v92, 7
    %v94 = vsub.s32 6, %v93
    %v95 = vrot.slane %v64, %v94
    %v96 = vlaneseq
    %v97 = vshrl.u32 %v96, 7
    %v98 = vsub.s32 7, %v97
    %v99 = vrot.slane %v64, %v98
    %v100 = vlaneseq
    %v101 = vshrl.u32 %v100, 7
    %v102 = vsub.s32 0, %v101
    %v103 = vrot.slane %v65, %v102
    %v104 = vlaneseq
    %v105 = vshrl.u32 %v104, 7
    %v106 = vsub.s32 1, %v105
    %v107 = vrot.slane %v65, %v106
    %v108 = vlaneseq
    %v109 = vshrl.u32 %v108, 7
    %v110 = vsub.s32 2, %v109
    %v111 = vrot.slane %v65, %v110
    %v112 = vlaneseq
    %v113 = vshrl.u32 %v112, 7
    %v114 = vsub.s32 3, %v113
    %v115 = vrot.slane %v65, %v114
    %v116 = vlaneseq
    %v117 = vshrl.u32 %v116, 7
    %v118 = vsub.s32 4, %v117
    %v119 = vrot.slane %v65, %v118
    %v120 = vlaneseq
    %v121 = vshrl.u32 %v120, 7
    %v122 = vsub.s32 5, %v121
    %v123 = vrot.slane %v65, %v122
    %v124 = vlaneseq
    %v125 = vshrl.u32 %v124, 7
    %v126 = vsub.s32 6, %v125
    %v127 = vrot.slane %v65, %v126
    %v128 = vlaneseq
    %v129 = vshrl.u32 %v128, 7
    %v130 = vsub.s32 7, %v129
    %v131 = vrot.slane %v65, %v130
    %vm148 = vcmask 1040384
    %v149 = vsel %vm148, %v71, 0.0
    %v150 = vsel %vm148, %v75, 0.0
    %v151 = vadd.f32 %v149, %v150
    %v152 = vsel %vm148, %v79, 0.0
    %v153 = vadd.f32 %v151, %v152
    %v154 = vsel %vm148, %v83, 0.0
    %v155 = vadd.f32 %v153, %v154
    %v156 = vsel %vm148, %v87, 0.0
    %v157 = vadd.f32 %v155, %v156
    %v158 = vsel %vm148, %v91, 0.0
    %v159 = vadd.f32 %v157, %v158
    %v160 = vsel %vm148, %v95, 0.0
    %v161 = vadd.f32 %v159, %v160
    %v162 = vsel %vm148, %v99, 0.0
    %v163 = vadd.f32 %v161, %v162
    %v164 = vsel %vm148, %v103, 0.0
    %v165 = vadd.f32 %v163, %v164
    %v166 = vsel %vm148, %v107, 0.0
    %v167 = vadd.f32 %v165, %v166
    %v168 = vsel %vm148, %v111, 0.0
    %v169 = vadd.f32 %v167, %v168
    %v170 = vsel %vm148, %v115, 0.0
    %v171 = vadd.f32 %v169, %v170
    %v172 = vsel %vm148, %v119, 0.0
    %v173 = vadd.f32 %v171, %v172
    %v174 = vsel %vm148, %v123, 0.0
    %v175 = vadd.f32 %v173, %v174
    %v176 = vsel %vm148, %v127, 0.0
    %v177 = vadd.f32 %v175, %v176
    %v178 = vsel %vm148, %v131, 0.0
    %v179 = vadd.f32 %v177, %v178
    %180 = vadd.xlane.f32.xlu0 %v179
    %v181 = vpop.xlane.xlu0 %180
    %v182 = vadd.f32 %v62, 0.0
    %v183 = vadd.f32 %v63, 0.0
    %v186 = vlaneseq
    %v187 = vshrl.u32 %v186, 7
    %v188 = vsub.s32 0, %v187
    %v189 = vrot.slane %v182, %v188
    %v190 = vlaneseq
    %v191 = vshrl.u32 %v190, 7
    %v192 = vsub.s32 1, %v191
    %v193 = vrot.slane %v182, %v192
    %v194 = vlaneseq
    %v195 = vshrl.u32 %v194, 7
    %v196 = vsub.s32 2, %v195
    %v197 = vrot.slane %v182, %v196
    %v198 = vlaneseq
    %v199 = vshrl.u32 %v198, 7
    %v200 = vsub.s32 3, %v199
    %v201 = vrot.slane %v182, %v200
    %v202 = vlaneseq
    %v203 = vshrl.u32 %v202, 7
    %v204 = vsub.s32 4, %v203
    %v205 = vrot.slane %v182, %v204
    %v206 = vlaneseq
    %v207 = vshrl.u32 %v206, 7
    %v208 = vsub.s32 5, %v207
    %v209 = vrot.slane %v182, %v208
    %v210 = vlaneseq
    %v211 = vshrl.u32 %v210, 7
    %v212 = vsub.s32 6, %v211
    %v213 = vrot.slane %v182, %v212
    %v214 = vlaneseq
    %v215 = vshrl.u32 %v214, 7
    %v216 = vsub.s32 7, %v215
    %v217 = vrot.slane %v182, %v216
    %v218 = vlaneseq
    %v219 = vshrl.u32 %v218, 7
    %v220 = vsub.s32 0, %v219
    %v221 = vrot.slane %v183, %v220
    %v222 = vlaneseq
    %v223 = vshrl.u32 %v222, 7
    %v224 = vsub.s32 1, %v223
    %v225 = vrot.slane %v183, %v224
    %v226 = vlaneseq
    %v227 = vshrl.u32 %v226, 7
    %v228 = vsub.s32 2, %v227
    %v229 = vrot.slane %v183, %v228
    %v230 = vlaneseq
    %v231 = vshrl.u32 %v230, 7
    %v232 = vsub.s32 3, %v231
    %v233 = vrot.slane %v183, %v232
    %v234 = vlaneseq
    %v235 = vshrl.u32 %v234, 7
    %v236 = vsub.s32 4, %v235
    %v237 = vrot.slane %v183, %v236
    %v238 = vlaneseq
    %v239 = vshrl.u32 %v238, 7
    %v240 = vsub.s32 5, %v239
    %v241 = vrot.slane %v183, %v240
    %v242 = vlaneseq
    %v243 = vshrl.u32 %v242, 7
    %v244 = vsub.s32 6, %v243
    %v245 = vrot.slane %v183, %v244
    %v246 = vlaneseq
    %v247 = vshrl.u32 %v246, 7
    %v248 = vsub.s32 7, %v247
    %v249 = vrot.slane %v183, %v248
    %v266 = vsel %vm148, %v189, 0.0
    %v267 = vsel %vm148, %v193, 0.0
    %v268 = vadd.f32 %v266, %v267
    %v269 = vsel %vm148, %v197, 0.0
    %v270 = vadd.f32 %v268, %v269
    %v271 = vsel %vm148, %v201, 0.0
    %v272 = vadd.f32 %v270, %v271
    %v273 = vsel %vm148, %v205, 0.0
    %v274 = vadd.f32 %v272, %v273
    %v275 = vsel %vm148, %v209, 0.0
    %v276 = vadd.f32 %v274, %v275
    %v277 = vsel %vm148, %v213, 0.0
    %v278 = vadd.f32 %v276, %v277
    %v279 = vsel %vm148, %v217, 0.0
    %v280 = vadd.f32 %v278, %v279
    %v281 = vsel %vm148, %v221, 0.0
    %v282 = vadd.f32 %v280, %v281
    %v283 = vsel %vm148, %v225, 0.0
    %v284 = vadd.f32 %v282, %v283
    %v285 = vsel %vm148, %v229, 0.0
    %v286 = vadd.f32 %v284, %v285
    %v287 = vsel %vm148, %v233, 0.0
    %v288 = vadd.f32 %v286, %v287
    %v289 = vsel %vm148, %v237, 0.0
    %v290 = vadd.f32 %v288, %v289
    %v291 = vsel %vm148, %v241, 0.0
    %v292 = vadd.f32 %v290, %v291
    %v293 = vsel %vm148, %v245, 0.0
    %v294 = vadd.f32 %v292, %v293
    %v295 = vsel %vm148, %v249, 0.0
    %v296 = vadd.f32 %v294, %v295
    %297 = vadd.xlane.f32.xlu0 %v296
    %v298 = vpop.xlane.xlu0 %297
    %v299 = vadd.f32 %v36, 0.0
    %v300 = vadd.f32 %v37, 0.0
    %v303 = vlaneseq
    %v304 = vshrl.u32 %v303, 7
    %v305 = vsub.s32 0, %v304
    %v306 = vrot.slane %v299, %v305
    %v307 = vlaneseq
    %v308 = vshrl.u32 %v307, 7
    %v309 = vsub.s32 1, %v308
    %v310 = vrot.slane %v299, %v309
    %v311 = vlaneseq
    %v312 = vshrl.u32 %v311, 7
    %v313 = vsub.s32 2, %v312
    %v314 = vrot.slane %v299, %v313
    %v315 = vlaneseq
    %v316 = vshrl.u32 %v315, 7
    %v317 = vsub.s32 3, %v316
    %v318 = vrot.slane %v299, %v317
    %v319 = vlaneseq
    %v320 = vshrl.u32 %v319, 7
    %v321 = vsub.s32 4, %v320
    %v322 = vrot.slane %v299, %v321
    %v323 = vlaneseq
    %v324 = vshrl.u32 %v323, 7
    %v325 = vsub.s32 5, %v324
    %v326 = vrot.slane %v299, %v325
    %v327 = vlaneseq
    %v328 = vshrl.u32 %v327, 7
    %v329 = vsub.s32 6, %v328
    %v330 = vrot.slane %v299, %v329
    %v331 = vlaneseq
    %v332 = vshrl.u32 %v331, 7
    %v333 = vsub.s32 7, %v332
    %v334 = vrot.slane %v299, %v333
    %v335 = vlaneseq
    %v336 = vshrl.u32 %v335, 7
    %v337 = vsub.s32 0, %v336
    %v338 = vrot.slane %v300, %v337
    %v339 = vlaneseq
    %v340 = vshrl.u32 %v339, 7
    %v341 = vsub.s32 1, %v340
    %v342 = vrot.slane %v300, %v341
    %v343 = vlaneseq
    %v344 = vshrl.u32 %v343, 7
    %v345 = vsub.s32 2, %v344
    %v346 = vrot.slane %v300, %v345
    %v347 = vlaneseq
    %v348 = vshrl.u32 %v347, 7
    %v349 = vsub.s32 3, %v348
    %v350 = vrot.slane %v300, %v349
    %v351 = vlaneseq
    %v352 = vshrl.u32 %v351, 7
    %v353 = vsub.s32 4, %v352
    %v354 = vrot.slane %v300, %v353
    %v355 = vlaneseq
    %v356 = vshrl.u32 %v355, 7
    %v357 = vsub.s32 5, %v356
    %v358 = vrot.slane %v300, %v357
    %v359 = vlaneseq
    %v360 = vshrl.u32 %v359, 7
    %v361 = vsub.s32 6, %v360
    %v362 = vrot.slane %v300, %v361
    %v363 = vlaneseq
    %v364 = vshrl.u32 %v363, 7
    %v365 = vsub.s32 7, %v364
    %v366 = vrot.slane %v300, %v365
    %v383 = vsel %vm148, %v306, 0.0
    %v384 = vsel %vm148, %v310, 0.0
    %v385 = vadd.f32 %v383, %v384
    %v386 = vsel %vm148, %v314, 0.0
    %v387 = vadd.f32 %v385, %v386
    %v388 = vsel %vm148, %v318, 0.0
    %v389 = vadd.f32 %v387, %v388
    %v390 = vsel %vm148, %v322, 0.0
    %v391 = vadd.f32 %v389, %v390
    %v392 = vsel %vm148, %v326, 0.0
    %v393 = vadd.f32 %v391, %v392
    %v394 = vsel %vm148, %v330, 0.0
    %v395 = vadd.f32 %v393, %v394
    %v396 = vsel %vm148, %v334, 0.0
    %v397 = vadd.f32 %v395, %v396
    %v398 = vsel %vm148, %v338, 0.0
    %v399 = vadd.f32 %v397, %v398
    %v400 = vsel %vm148, %v342, 0.0
    %v401 = vadd.f32 %v399, %v400
    %v402 = vsel %vm148, %v346, 0.0
    %v403 = vadd.f32 %v401, %v402
    %v404 = vsel %vm148, %v350, 0.0
    %v405 = vadd.f32 %v403, %v404
    %v406 = vsel %vm148, %v354, 0.0
    %v407 = vadd.f32 %v405, %v406
    %v408 = vsel %vm148, %v358, 0.0
    %v409 = vadd.f32 %v407, %v408
    %v410 = vsel %vm148, %v362, 0.0
    %v411 = vadd.f32 %v409, %v410
    %v412 = vsel %vm148, %v366, 0.0
    %v413 = vadd.f32 %v411, %v412
    %414 = vadd.xlane.f32.xlu0 %v413
    %v415 = vpop.xlane.xlu0 %414
    %v416 = vlaneseq
    %v417 = vand.u32 %v416, 127
    %v418 = vlaneseq
    %v419 = vshrl.u32 %v418, 7
    %vm420 = vcmp.eq.s32.totalorder %v419, 0
    %vm421 = vcmp.eq.s32.totalorder %v417, 0
    %vm422 = vmand %vm420, %vm421
    %v423 = vlaneseq
    %v424 = vshrl.u32 %v423, 7
    %v425 = vsub.s32 0, %v424
    %v426 = vrot.slane %v181, %v425
    %v427 = vsel %vm422, %v426, 0.0
    %vm428 = vcmp.eq.s32.totalorder %v417, 1
    %vm429 = vmand %vm420, %vm428
    %v430 = vlaneseq
    %v431 = vshrl.u32 %v430, 7
    %v432 = vsub.s32 0, %v431
    %v433 = vrot.slane %v298, %v432
    %v434 = vsel %vm429, %v433, 0.0
    %v435 = vadd.f32 %v427, %v434
    %vm436 = vcmp.eq.s32.totalorder %v417, 2
    %vm437 = vmand %vm420, %vm436
    %v438 = vlaneseq
    %v439 = vshrl.u32 %v438, 7
    %v440 = vsub.s32 0, %v439
    %v441 = vrot.slane %v415, %v440
    %v442 = vsel %vm437, %v441, 0.0
    %v443 = vadd.f32 %v435, %v442
    %444 = vst [vmem:[#allocation7] sm:$0xff] %v443
    // Predicated region
    $region18: #{tpu_custom_call.1} parent=1 // pred_check
      _
    $region19: #{tpu_custom_call.1} parent=1 // pred_check_branch
      %446 = sbr.rel (0) target = $region21
    $region20: #{tpu_custom_call.1} parent=1 // pred_region
      %s448 = ssub.s32 128, 128
      %449 = vsyncadd [#allocation4], %s448
      %s451 = sshll.u32 [#allocation7], 4
      %s452 = int_to_ptr.vmem [resolvable:$true] %s451
      %454 = dma.vmem_to_hbm [thread:$0]  %s452, 128, %s2, [#allocation4]
    $region21: #{tpu_custom_call.1} parent=1 // pred_fallthru
      _
    // Predicated region
    $region22: #{tpu_custom_call.1} parent=1 // pred_check
      _
    $region23: #{tpu_custom_call.1} parent=1 // pred_check_branch
      %456 = sbr.rel (0) target = $region25
    $region24: #{tpu_custom_call.1} parent=1 // pred_region
      %457 = dma.done [#allocation4], 128
    $region25: #{tpu_custom_call.1} parent=1 // pred_fallthru
      _
    %458 = vsyncpa [#allocation3], 1
    %459 = vsyncpa [#allocation6], 1
    %460 = vsyncpa [#allocation4], 1

</llo_original>
